<compile_context>
chip_gen: v5e
topology: v5e:2x2
jax: 0.10.0
libtpu: 0.0.40
codegen_flags: <defaults>
</compile_context>

<pallas_src>
import functools

import jax
import jax.numpy as jnp
import numpy as np
from jax import lax
from jax.experimental import pallas as pl
from jax.experimental.pallas import tpu as pltpu

ALIVE_THRESH = 0.1
# Sobel taps (used by the pure-JAX reference; the kernel uses their separable form).
SOBEL_X = np.array([[-1, 0, 1], [-2, 0, 2], [-1, 0, 1]], np.float32) / 8.0
SOBEL_Y = np.array([[1, 2, 1], [0, 0, 0], [-1, -2, -1]], np.float32) / 8.0


def _nca_fused_kernel(x_ref, w1_ref, b1_ref, w2_ref, o_ref, *, channels):
    """Runs ALL NCA steps in one kernel invocation (everything VMEM-resident).

    Layouts (all f32):
      x_ref : (N, H, W*C)           initial state, channels interleaved on lanes
      w1_ref: (3*W*C, W*HID)        block-diag merged first 1x1-conv weight
      b1_ref: (1, W*HID)            first-layer bias tiled per pixel column
      w2_ref: (W*HID, W*C)          block-diag second 1x1-conv weight
      o_ref : (steps+1, N, H, W*C)  o_ref[0] = input, o_ref[s+1] = state after step s
    """
    C = channels
    N, H, WC = x_ref.shape
    steps = o_ref.shape[0] - 1

    # Weights loaded once, live for all steps.
    w1 = w1_ref[...]
    b1 = b1_ref[...]
    w2 = w2_ref[...]

    # Static channel-0 lane mask, hoisted out of the step loop.
    lane = lax.broadcasted_iota(jnp.int32, (N, H, WC), 2)
    c0_lane = (lane % C) == 0

    def wshift(a, d):
        # a[n, i, (j+d) % W, c] : circular shift in W; lanes are (w, c)-interleaved,
        # so a whole-row lane roll by d*C wraps correctly within each image row.
        return jnp.roll(a, -d * C, axis=2)

    def hshift(a, d):
        # a[n, (i+d) % H, j, c] : circular shift in H (sublane axis, per image).
        return jnp.roll(a, -d, axis=1)

    def bcast_c0(v):
        # Replace every C-lane pixel block with its channel-0 value (per-pixel
        # scalar broadcast) without leaving the lane-dense interleaved layout.
        # Each target lane receives exactly one nonzero contribution.
        v0 = jnp.where(c0_lane, v, 0.0)
        out = v0
        for k in range(1, C):
            out = out + jnp.roll(v0, k, axis=2)
        return out

    def alive(center, w_plus, w_minus):
        # 3x3 circular max-pool of channel 0 (> ALIVE_THRESH), broadcast over C.
        # Pooling is done per-channel (same vreg count -> free) so the caller's
        # W shifts can be reused; channel 0 is extracted once at the end.
        mw = jnp.maximum(jnp.maximum(center, w_plus), w_minus)
        m3 = jnp.maximum(jnp.maximum(mw, hshift(mw, 1)), hshift(mw, -1))
        return bcast_c0(m3) > ALIVE_THRESH

    def step(s, x):
        xw_p = wshift(x, 1)    # x[:, i, j+1, :]
        xw_m = wshift(x, -1)   # x[:, i, j-1, :]

        pre_life = alive(x, xw_p, xw_m)   # reuses the perception W shifts

        # Separable depthwise perception: identity / sobel_x / sobel_y.
        gx = xw_p - xw_m                                     # x[j+1] - x[j-1]
        sx = (hshift(gx, -1) + 2.0 * gx + hshift(gx, 1)) * 0.125
        sw = xw_m + 2.0 * x + xw_p                           # W-smoothed x
        sy = (hshift(sw, -1) - hshift(sw, 1)) * 0.125

        # "rule" MLP: two lane-dense MXU matmuls with block-diagonal weights,
        # computed directly in the interleaved layout (no per-pixel relayout).
        feats = jnp.concatenate([x, sx, sy], axis=2).reshape(N * H, 3 * WC)
        h = jnp.dot(feats, w1, preferred_element_type=jnp.float32) + b1
        h = jnp.maximum(h, 0.0)
        delta = jnp.dot(h, w2, preferred_element_type=jnp.float32)
        xn = x + delta.reshape(N, H, WC)

        post_life = alive(xn, wshift(xn, 1), wshift(xn, -1))
        life = jnp.logical_and(pre_life, post_life)
        xn = xn * life.astype(xn.dtype)        # alive_mask=True branch

        o_ref[s + 1] = xn
        return xn

    x0 = x_ref[...]
    o_ref[0] = x0
    lax.fori_loop(0, steps, step, x0)


def _pack_rule_weights(w1_id, w1_sx, w1_sy, b1, w2t, width):
    """Pack the 1x1-conv 'rule' weights into block-diagonal matrices acting on the
    channel-interleaved lane layout: h[p, j*HID+k] = sum_c feat[p, j*C+c] * w[c, k]."""
    eye = jnp.eye(width, dtype=jnp.float32)
    w1_cat = jnp.concatenate(
        [jnp.kron(eye, w1_id.astype(jnp.float32)),
         jnp.kron(eye, w1_sx.astype(jnp.float32)),
         jnp.kron(eye, w1_sy.astype(jnp.float32))], axis=0)        # (3*W*C, W*HID)
    hid = w1_id.shape[1]
    b1_tiled = jnp.tile(jnp.reshape(b1, (1, hid)).astype(jnp.float32), (1, width))
    w2_blk = jnp.kron(eye, w2t.astype(jnp.float32))                # (W*HID, W*C)
    return w1_cat, b1_tiled, w2_blk


@functools.partial(jax.jit, static_argnames=("steps",))
def simple_nca_forward(x_nchw, w1_id, w1_sx, w1_sy, b1, w2t, steps):
    """SimpleNCA.forward: returns (steps+1, N, C, H, W) like torch.stack(seq)."""
    N, C, H, W = x_nchw.shape
    # External API is NCHW (PyTorch); the kernel state is (N, H, W*C) with
    # channels interleaved on the lane axis (lane-dense stencil/mask/residual).
    x0 = jnp.transpose(x_nchw, (0, 2, 3, 1)).astype(jnp.float32).reshape(N, H, W * C)
    w1_cat, b1_tiled, w2_blk = _pack_rule_weights(w1_id, w1_sx, w1_sy, b1, w2t, W)

    vmem = pl.BlockSpec(memory_space=pltpu.MemorySpace.VMEM)
    # TODO(synk): for large N/H/W, add a spatial/batch grid (halo via index_map,
    # dimension_semantics=("parallel", "arbitrary")) so v7x's two TensorCores and
    # its smaller 64 MiB VMEM are handled; at this toy size everything
    # (state + packed weights + all per-step outputs) fits comfortably in VMEM.
    seq = pl.pallas_call(
        functools.partial(_nca_fused_kernel, channels=C),
        out_shape=jax.ShapeDtypeStruct((steps + 1, N, H, W * C), jnp.float32),
        in_specs=[vmem, vmem, vmem, vmem],
        out_specs=vmem,
    )(x0, w1_cat, b1_tiled, w2_blk)

    seq = seq.reshape(steps + 1, N, H, W, C)
    return jnp.transpose(seq, (0, 1, 4, 2, 3))   # (steps+1, N, C, H, W)


def _ref_forward(x_nchw, w1_id, w1_sx, w1_sy, b1, w2t, steps):
    # Pure-JAX reference (wrap-pad + window slices), mirrors the PyTorch module.
    x = jnp.transpose(x_nchw, (0, 2, 3, 1)).astype(jnp.float32)
    N, H, W, C = x.shape

    def win(xp, dy, dx):
        return xp[:, 1 + dy:1 + dy + H, 1 + dx:1 + dx + W, :]

    def alive(a):
        ap = jnp.pad(a[..., :1], ((0, 0), (1, 1), (1, 1), (0, 0)), mode="wrap")
        m = win(ap, 0, 0)
        for dy in (-1, 0, 1):
            for dx in (-1, 0, 1):
                m = jnp.maximum(m, win(ap, dy, dx))
        return m > ALIVE_THRESH

    seq = [x]
    for _ in range(steps):
        pre = alive(x)
        xp = jnp.pad(x, ((0, 0), (1, 1), (1, 1), (0, 0)), mode="wrap")
        sx = sum(float(SOBEL_X[ky, kx]) * win(xp, ky - 1, kx - 1)
                 for ky in range(3) for kx in range(3) if SOBEL_X[ky, kx] != 0)
        sy = sum(float(SOBEL_Y[ky, kx]) * win(xp, ky - 1, kx - 1)
                 for ky in range(3) for kx in range(3) if SOBEL_Y[ky, kx] != 0)
        h = jnp.maximum(x @ w1_id + sx @ w1_sx + sy @ w1_sy + b1, 0.0)
        x = x + h @ w2t
        post = alive(x)
        x = x * jnp.logical_and(pre, post).astype(x.dtype)
        seq.append(x)
    return jnp.transpose(jnp.stack(seq), (0, 1, 4, 2, 3))


if __name__ == "__main__":
    N, C, H, W, HID, STEPS = 2, 4, 16, 16, 32, 3

    key = jax.random.PRNGKey(0)
    k_x, k_w1, k_b1, k_w2 = jax.random.split(key, 4)

    x = jax.random.uniform(k_x, (N, C, H, W), jnp.float32)      # NCHW like torch

    # Synthetic "rule" parameters matching the PyTorch shapes:
    #   rule[0] = Conv2d(3C, hid, 1): weight (hid, 3C), bias (hid,)
    #   rule[2] = Conv2d(hid, C, 1, bias=False): weight (C, hid)
    # NOTE: the PyTorch module zero-inits rule[-1].weight (delta would be 0);
    # nonzero values are used here so the kernel's hot path is exercised.
    w1 = 0.3 * jax.random.normal(k_w1, (HID, 3 * C), jnp.float32)
    b1 = 0.1 * jax.random.normal(k_b1, (HID,), jnp.float32)
    w2 = 0.3 * jax.random.normal(k_w2, (C, HID), jnp.float32)

    # The depthwise perception output is interleaved [id_c, sx_c, sy_c, ...];
    # split the first conv's input dim into per-feature (C, hid) blocks.
    w1_id = jnp.transpose(w1[:, 0::3])   # (C, hid)
    w1_sx = jnp.transpose(w1[:, 1::3])   # (C, hid)
    w1_sy = jnp.transpose(w1[:, 2::3])   # (C, hid)
    b1r = b1.reshape(1, HID)
    w2t = jnp.transpose(w2)              # (hid, C)

    out = simple_nca_forward(x, w1_id, w1_sx, w1_sy, b1r, w2t, STEPS)
    out = jax.block_until_ready(out)
    assert out.shape == (STEPS + 1, N, C, H, W), out.shape

    ref = _ref_forward(x, w1_id, w1_sx, w1_sy, b1r, w2t, STEPS)
    np.testing.assert_allclose(np.asarray(out), np.asarray(ref), rtol=1e-4, atol=1e-4)

    print("KERNEL_OK")
</pallas_src>

<mosaic_0001>
module attributes {stable_mosaic.version = 11 : i64} {
  func.func @_nca_fused_kernel(%arg0: memref<2x16x64xf32, #tpu.memory_space<vmem>>, %arg1: memref<192x512xf32, #tpu.memory_space<vmem>>, %arg2: memref<1x512xf32, #tpu.memory_space<vmem>>, %arg3: memref<512x64xf32, #tpu.memory_space<vmem>>, %arg4: memref<4x2x16x64xf32, #tpu.memory_space<vmem>>) attributes {dimension_semantics = [], scalar_prefetch = 0 : i64, scratch_operands = 0 : i64, tpu.core_type = #tpu.core_type<tc>} {
    %c0 = arith.constant 0 : index
    %c0_0 = arith.constant 0 : index
    %0 = vector.load %arg1[%c0, %c0_0] : memref<192x512xf32, #tpu.memory_space<vmem>>, vector<192x512xf32>
    %c0_1 = arith.constant 0 : index
    %c0_2 = arith.constant 0 : index
    %1 = vector.load %arg2[%c0_1, %c0_2] : memref<1x512xf32, #tpu.memory_space<vmem>>, vector<1x512xf32>
    %c0_3 = arith.constant 0 : index
    %c0_4 = arith.constant 0 : index
    %2 = vector.load %arg3[%c0_3, %c0_4] : memref<512x64xf32, #tpu.memory_space<vmem>>, vector<512x64xf32>
    %3 = tpu.iota {dimensions = array<i32: 2>} : vector<2x16x64xi32>
    %c4_i32 = arith.constant 4 : i32
    %c0_i32 = arith.constant 0 : i32
    %4 = arith.cmpi eq, %c4_i32, %c0_i32 : i32
    %c1_i32 = arith.constant 1 : i32
    %5 = arith.select %4, %c1_i32, %c4_i32 : i32
    %6 = vector.broadcast %5 : i32 to vector<2x16x64xi32>
    %7 = arith.remsi %3, %6 : vector<2x16x64xi32>
    %c0_i32_5 = arith.constant 0 : i32
    %8 = vector.broadcast %c0_i32_5 : i32 to vector<2x16x64xi32>
    %9 = arith.cmpi ne, %7, %8 : vector<2x16x64xi32>
    %c0_i32_6 = arith.constant 0 : i32
    %10 = vector.broadcast %c0_i32_6 : i32 to vector<2x16x64xi32>
    %11 = arith.cmpi slt, %7, %10 : vector<2x16x64xi32>
    %c0_i32_7 = arith.constant 0 : i32
    %12 = arith.cmpi slt, %5, %c0_i32_7 : i32
    %13 = vector.broadcast %12 : i1 to vector<2x16x64xi1>
    %14 = vector.broadcast %13 : vector<2x16x64xi1> to vector<2x16x64xi1>
    %15 = arith.xori %11, %14 : vector<2x16x64xi1>
    %16 = arith.andi %15, %9 : vector<2x16x64xi1>
    %17 = vector.broadcast %5 : i32 to vector<2x16x64xi32>
    %18 = arith.addi %7, %17 : vector<2x16x64xi32>
    %19 = arith.select %16, %18, %7 : vector<2x16x64xi1>, vector<2x16x64xi32>
    %c0_i32_8 = arith.constant 0 : i32
    %20 = vector.broadcast %c0_i32_8 : i32 to vector<2x16x64xi32>
    %21 = arith.cmpi eq, %19, %20 : vector<2x16x64xi32>
    %c0_9 = arith.constant 0 : index
    %c0_10 = arith.constant 0 : index
    %c0_11 = arith.constant 0 : index
    %22 = vector.load %arg0[%c0_9, %c0_10, %c0_11] : memref<2x16x64xf32, #tpu.memory_space<vmem>>, vector<2x16x64xf32>
    %c0_12 = arith.constant 0 : index
    %c0_13 = arith.constant 0 : index
    %c0_14 = arith.constant 0 : index
    %c0_15 = arith.constant 0 : index
    %23 = vector.load %arg4[%c0_12, %c0_13, %c0_14, %c0_15] : memref<4x2x16x64xf32, #tpu.memory_space<vmem>>, vector<1x2x16x64xf32>
    %24 = vector.shape_cast %23 : vector<1x2x16x64xf32> to vector<2x16x64xf32>
    %25 = vector.shape_cast %22 : vector<2x16x64xf32> to vector<1x2x16x64xf32>
    tpu.vector_store %arg4[%c0_12, %c0_13, %c0_14, %c0_15], %25 {strides = array<i32>} : memref<4x2x16x64xf32, #tpu.memory_space<vmem>>, vector<1x2x16x64xf32>,
    %c0_i32_16 = arith.constant 0 : i32
    %c3_i32 = arith.constant 3 : i32
    %26 = arith.addi %c0_i32_16, %c3_i32 : i32
    %c1_i32_17 = arith.constant 1 : i32
    %27 = scf.for %arg5 = %c0_i32_16 to %26 step %c1_i32_17 iter_args(%arg6 = %22) -> (vector<2x16x64xf32>)  : i32 {
      %28 = vector.extract_strided_slice %arg6 {offsets = [0, 0, 4], sizes = [2, 16, 60], strides = [1, 1, 1]} : vector<2x16x64xf32> to vector<2x16x60xf32>
      %29 = vector.extract_strided_slice %arg6 {offsets = [0, 0, 0], sizes = [2, 16, 4], strides = [1, 1, 1]} : vector<2x16x64xf32> to vector<2x16x4xf32>
      %30 = tpu.concatenate %28, %29 in 2 : vector<2x16x60xf32>, vector<2x16x4xf32> -> vector<2x16x64xf32>
      %31 = vector.extract_strided_slice %arg6 {offsets = [0, 0, 60], sizes = [2, 16, 4], strides = [1, 1, 1]} : vector<2x16x64xf32> to vector<2x16x4xf32>
      %32 = vector.extract_strided_slice %arg6 {offsets = [0, 0, 0], sizes = [2, 16, 60], strides = [1, 1, 1]} : vector<2x16x64xf32> to vector<2x16x60xf32>
      %33 = tpu.concatenate %31, %32 in 2 : vector<2x16x4xf32>, vector<2x16x60xf32> -> vector<2x16x64xf32>
      %34 = arith.maximumf %arg6, %30 : vector<2x16x64xf32>
      %35 = arith.maximumf %34, %33 : vector<2x16x64xf32>
      %36 = vector.extract_strided_slice %35 {offsets = [0, 1, 0], sizes = [2, 15, 64], strides = [1, 1, 1]} : vector<2x16x64xf32> to vector<2x15x64xf32>
      %37 = vector.extract_strided_slice %35 {offsets = [0, 0, 0], sizes = [2, 1, 64], strides = [1, 1, 1]} : vector<2x16x64xf32> to vector<2x1x64xf32>
      %38 = tpu.concatenate %36, %37 in 1 : vector<2x15x64xf32>, vector<2x1x64xf32> -> vector<2x16x64xf32>
      %39 = arith.maximumf %35, %38 : vector<2x16x64xf32>
      %40 = vector.extract_strided_slice %35 {offsets = [0, 15, 0], sizes = [2, 1, 64], strides = [1, 1, 1]} : vector<2x16x64xf32> to vector<2x1x64xf32>
      %41 = vector.extract_strided_slice %35 {offsets = [0, 0, 0], sizes = [2, 15, 64], strides = [1, 1, 1]} : vector<2x16x64xf32> to vector<2x15x64xf32>
      %42 = tpu.concatenate %40, %41 in 1 : vector<2x1x64xf32>, vector<2x15x64xf32> -> vector<2x16x64xf32>
      %43 = arith.maximumf %39, %42 : vector<2x16x64xf32>
      %cst = arith.constant 0.000000e+00 : f32
      %44 = vector.broadcast %cst : f32 to vector<2x16x64xf32>
      %45 = arith.select %21, %43, %44 : vector<2x16x64xi1>, vector<2x16x64xf32>
      %46 = vector.extract_strided_slice %45 {offsets = [0, 0, 63], sizes = [2, 16, 1], strides = [1, 1, 1]} : vector<2x16x64xf32> to vector<2x16x1xf32>
      %47 = vector.extract_strided_slice %45 {offsets = [0, 0, 0], sizes = [2, 16, 63], strides = [1, 1, 1]} : vector<2x16x64xf32> to vector<2x16x63xf32>
      %48 = tpu.concatenate %46, %47 in 2 : vector<2x16x1xf32>, vector<2x16x63xf32> -> vector<2x16x64xf32>
      %49 = arith.addf %45, %48 : vector<2x16x64xf32>
      %50 = vector.extract_strided_slice %45 {offsets = [0, 0, 62], sizes = [2, 16, 2], strides = [1, 1, 1]} : vector<2x16x64xf32> to vector<2x16x2xf32>
      %51 = vector.extract_strided_slice %45 {offsets = [0, 0, 0], sizes = [2, 16, 62], strides = [1, 1, 1]} : vector<2x16x64xf32> to vector<2x16x62xf32>
      %52 = tpu.concatenate %50, %51 in 2 : vector<2x16x2xf32>, vector<2x16x62xf32> -> vector<2x16x64xf32>
      %53 = arith.addf %49, %52 : vector<2x16x64xf32>
      %54 = vector.extract_strided_slice %45 {offsets = [0, 0, 61], sizes = [2, 16, 3], strides = [1, 1, 1]} : vector<2x16x64xf32> to vector<2x16x3xf32>
      %55 = vector.extract_strided_slice %45 {offsets = [0, 0, 0], sizes = [2, 16, 61], strides = [1, 1, 1]} : vector<2x16x64xf32> to vector<2x16x61xf32>
      %56 = tpu.concatenate %54, %55 in 2 : vector<2x16x3xf32>, vector<2x16x61xf32> -> vector<2x16x64xf32>
      %57 = arith.addf %53, %56 : vector<2x16x64xf32>
      %cst_19 = arith.constant 1.000000e-01 : f32
      %58 = vector.broadcast %cst_19 : f32 to vector<2x16x64xf32>
      %59 = arith.cmpf ogt, %57, %58 : vector<2x16x64xf32>
      %60 = arith.subf %30, %33 : vector<2x16x64xf32>
      %61 = vector.extract_strided_slice %60 {offsets = [0, 15, 0], sizes = [2, 1, 64], strides = [1, 1, 1]} : vector<2x16x64xf32> to vector<2x1x64xf32>
      %62 = vector.extract_strided_slice %60 {offsets = [0, 0, 0], sizes = [2, 15, 64], strides = [1, 1, 1]} : vector<2x16x64xf32> to vector<2x15x64xf32>
      %63 = tpu.concatenate %61, %62 in 1 : vector<2x1x64xf32>, vector<2x15x64xf32> -> vector<2x16x64xf32>
      %cst_20 = arith.constant 2.000000e+00 : f32
      %64 = vector.broadcast %cst_20 : f32 to vector<2x16x64xf32>
      %65 = arith.mulf %64, %60 : vector<2x16x64xf32>
      %66 = arith.addf %63, %65 : vector<2x16x64xf32>
      %67 = vector.extract_strided_slice %60 {offsets = [0, 1, 0], sizes = [2, 15, 64], strides = [1, 1, 1]} : vector<2x16x64xf32> to vector<2x15x64xf32>
      %68 = vector.extract_strided_slice %60 {offsets = [0, 0, 0], sizes = [2, 1, 64], strides = [1, 1, 1]} : vector<2x16x64xf32> to vector<2x1x64xf32>
      %69 = tpu.concatenate %67, %68 in 1 : vector<2x15x64xf32>, vector<2x1x64xf32> -> vector<2x16x64xf32>
      %70 = arith.addf %66, %69 : vector<2x16x64xf32>
      %cst_21 = arith.constant 1.250000e-01 : f32
      %71 = vector.broadcast %cst_21 : f32 to vector<2x16x64xf32>
      %72 = arith.mulf %70, %71 : vector<2x16x64xf32>
      %cst_22 = arith.constant 2.000000e+00 : f32
      %73 = vector.broadcast %cst_22 : f32 to vector<2x16x64xf32>
      %74 = arith.mulf %73, %arg6 : vector<2x16x64xf32>
      %75 = arith.addf %33, %74 : vector<2x16x64xf32>
      %76 = arith.addf %75, %30 : vector<2x16x64xf32>
      %77 = vector.extract_strided_slice %76 {offsets = [0, 15, 0], sizes = [2, 1, 64], strides = [1, 1, 1]} : vector<2x16x64xf32> to vector<2x1x64xf32>
      %78 = vector.extract_strided_slice %76 {offsets = [0, 0, 0], sizes = [2, 15, 64], strides = [1, 1, 1]} : vector<2x16x64xf32> to vector<2x15x64xf32>
      %79 = tpu.concatenate %77, %78 in 1 : vector<2x1x64xf32>, vector<2x15x64xf32> -> vector<2x16x64xf32>
      %80 = vector.extract_strided_slice %76 {offsets = [0, 1, 0], sizes = [2, 15, 64], strides = [1, 1, 1]} : vector<2x16x64xf32> to vector<2x15x64xf32>
      %81 = vector.extract_strided_slice %76 {offsets = [0, 0, 0], sizes = [2, 1, 64], strides = [1, 1, 1]} : vector<2x16x64xf32> to vector<2x1x64xf32>
      %82 = tpu.concatenate %80, %81 in 1 : vector<2x15x64xf32>, vector<2x1x64xf32> -> vector<2x16x64xf32>
      %83 = arith.subf %79, %82 : vector<2x16x64xf32>
      %cst_23 = arith.constant 1.250000e-01 : f32
      %84 = vector.broadcast %cst_23 : f32 to vector<2x16x64xf32>
      %85 = arith.mulf %83, %84 : vector<2x16x64xf32>
      %86 = tpu.concatenate %arg6, %72, %85 in 2 : vector<2x16x64xf32>, vector<2x16x64xf32>, vector<2x16x64xf32> -> vector<2x16x192xf32>
      %87 = vector.shape_cast %86 : vector<2x16x192xf32> to vector<32x192xf32>
      %cst_24 = arith.constant dense<0.000000e+00> : vector<32x512xf32>
      %88 = tpu.matmul %87, %0, %cst_24 {dimension_numbers = #tpu.dot_dimension_numbers<[1], [0], [0], [1], [0, 0, 1, 1], [], []>} : vector<32x192xf32>, vector<192x512xf32>, vector<32x512xf32> -> vector<32x512xf32>
      %89 = vector.broadcast %1 : vector<1x512xf32> to vector<32x512xf32>
      %90 = arith.addf %88, %89 : vector<32x512xf32>
      %cst_25 = arith.constant 0.000000e+00 : f32
      %91 = vector.broadcast %cst_25 : f32 to vector<32x512xf32>
      %92 = arith.maximumf %90, %91 : vector<32x512xf32>
      %cst_26 = arith.constant dense<0.000000e+00> : vector<32x64xf32>
      %93 = tpu.matmul %92, %2, %cst_26 {dimension_numbers = #tpu.dot_dimension_numbers<[1], [0], [0], [1], [0, 0, 1, 1], [], []>} : vector<32x512xf32>, vector<512x64xf32>, vector<32x64xf32> -> vector<32x64xf32>
      %94 = vector.shape_cast %93 : vector<32x64xf32> to vector<2x16x64xf32>
      %95 = arith.addf %arg6, %94 : vector<2x16x64xf32>
      %96 = vector.extract_strided_slice %95 {offsets = [0, 0, 4], sizes = [2, 16, 60], strides = [1, 1, 1]} : vector<2x16x64xf32> to vector<2x16x60xf32>
      %97 = vector.extract_strided_slice %95 {offsets = [0, 0, 0], sizes = [2, 16, 4], strides = [1, 1, 1]} : vector<2x16x64xf32> to vector<2x16x4xf32>
      %98 = tpu.concatenate %96, %97 in 2 : vector<2x16x60xf32>, vector<2x16x4xf32> -> vector<2x16x64xf32>
      %99 = vector.extract_strided_slice %95 {offsets = [0, 0, 60], sizes = [2, 16, 4], strides = [1, 1, 1]} : vector<2x16x64xf32> to vector<2x16x4xf32>
      %100 = vector.extract_strided_slice %95 {offsets = [0, 0, 0], sizes = [2, 16, 60], strides = [1, 1, 1]} : vector<2x16x64xf32> to vector<2x16x60xf32>
      %101 = tpu.concatenate %99, %100 in 2 : vector<2x16x4xf32>, vector<2x16x60xf32> -> vector<2x16x64xf32>
      %102 = arith.maximumf %95, %98 : vector<2x16x64xf32>
      %103 = arith.maximumf %102, %101 : vector<2x16x64xf32>
      %104 = vector.extract_strided_slice %103 {offsets = [0, 1, 0], sizes = [2, 15, 64], strides = [1, 1, 1]} : vector<2x16x64xf32> to vector<2x15x64xf32>
      %105 = vector.extract_strided_slice %103 {offsets = [0, 0, 0], sizes = [2, 1, 64], strides = [1, 1, 1]} : vector<2x16x64xf32> to vector<2x1x64xf32>
      %106 = tpu.concatenate %104, %105 in 1 : vector<2x15x64xf32>, vector<2x1x64xf32> -> vector<2x16x64xf32>
      %107 = arith.maximumf %103, %106 : vector<2x16x64xf32>
      %108 = vector.extract_strided_slice %103 {offsets = [0, 15, 0], sizes = [2, 1, 64], strides = [1, 1, 1]} : vector<2x16x64xf32> to vector<2x1x64xf32>
      %109 = vector.extract_strided_slice %103 {offsets = [0, 0, 0], sizes = [2, 15, 64], strides = [1, 1, 1]} : vector<2x16x64xf32> to vector<2x15x64xf32>
      %110 = tpu.concatenate %108, %109 in 1 : vector<2x1x64xf32>, vector<2x15x64xf32> -> vector<2x16x64xf32>
      %111 = arith.maximumf %107, %110 : vector<2x16x64xf32>
      %cst_27 = arith.constant 0.000000e+00 : f32
      %112 = vector.broadcast %cst_27 : f32 to vector<2x16x64xf32>
      %113 = arith.select %21, %111, %112 : vector<2x16x64xi1>, vector<2x16x64xf32>
      %114 = vector.extract_strided_slice %113 {offsets = [0, 0, 63], sizes = [2, 16, 1], strides = [1, 1, 1]} : vector<2x16x64xf32> to vector<2x16x1xf32>
      %115 = vector.extract_strided_slice %113 {offsets = [0, 0, 0], sizes = [2, 16, 63], strides = [1, 1, 1]} : vector<2x16x64xf32> to vector<2x16x63xf32>
      %116 = tpu.concatenate %114, %115 in 2 : vector<2x16x1xf32>, vector<2x16x63xf32> -> vector<2x16x64xf32>
      %117 = arith.addf %113, %116 : vector<2x16x64xf32>
      %118 = vector.extract_strided_slice %113 {offsets = [0, 0, 62], sizes = [2, 16, 2], strides = [1, 1, 1]} : vector<2x16x64xf32> to vector<2x16x2xf32>
      %119 = vector.extract_strided_slice %113 {offsets = [0, 0, 0], sizes = [2, 16, 62], strides = [1, 1, 1]} : vector<2x16x64xf32> to vector<2x16x62xf32>
      %120 = tpu.concatenate %118, %119 in 2 : vector<2x16x2xf32>, vector<2x16x62xf32> -> vector<2x16x64xf32>
      %121 = arith.addf %117, %120 : vector<2x16x64xf32>
      %122 = vector.extract_strided_slice %113 {offsets = [0, 0, 61], sizes = [2, 16, 3], strides = [1, 1, 1]} : vector<2x16x64xf32> to vector<2x16x3xf32>
      %123 = vector.extract_strided_slice %113 {offsets = [0, 0, 0], sizes = [2, 16, 61], strides = [1, 1, 1]} : vector<2x16x64xf32> to vector<2x16x61xf32>
      %124 = tpu.concatenate %122, %123 in 2 : vector<2x16x3xf32>, vector<2x16x61xf32> -> vector<2x16x64xf32>
      %125 = arith.addf %121, %124 : vector<2x16x64xf32>
      %cst_28 = arith.constant 1.000000e-01 : f32
      %126 = vector.broadcast %cst_28 : f32 to vector<2x16x64xf32>
      %127 = arith.cmpf ogt, %125, %126 : vector<2x16x64xf32>
      %128 = arith.andi %59, %127 : vector<2x16x64xi1>
      %129 = arith.extui %128 : vector<2x16x64xi1> to vector<2x16x64xi32>
      %130 = arith.sitofp %129 : vector<2x16x64xi32> to vector<2x16x64xf32>
      %131 = arith.mulf %95, %130 : vector<2x16x64xf32>
      %c1_i32_29 = arith.constant 1 : i32
      %132 = arith.addi %arg5, %c1_i32_29 : i32
      %133 = arith.index_cast %132 : i32 to index
      %c0_30 = arith.constant 0 : index
      %c0_31 = arith.constant 0 : index
      %c0_32 = arith.constant 0 : index
      %134 = vector.load %arg4[%133, %c0_30, %c0_31, %c0_32] : memref<4x2x16x64xf32, #tpu.memory_space<vmem>>, vector<1x2x16x64xf32>
      %135 = vector.shape_cast %134 : vector<1x2x16x64xf32> to vector<2x16x64xf32>
      %136 = vector.shape_cast %131 : vector<2x16x64xf32> to vector<1x2x16x64xf32>
      tpu.vector_store %arg4[%133, %c0_30, %c0_31, %c0_32], %136 {strides = array<i32>} : memref<4x2x16x64xf32, #tpu.memory_space<vmem>>, vector<1x2x16x64xf32>,
      scf.yield %131 : vector<2x16x64xf32>
    }
    %c3_i32_18 = arith.constant 3 : i32
    return
  }
}

</mosaic_0001>

<llo_original>
// kernel: simple_nca_forward.1
$region0: #{simple_nca_forward.1}
  #allocation0 [shape = 'u32[]', space=smem, size = 0x4, offset = 0x4, fixed_abs, tag = 'smem constant byte address 0x4 - core index']
  #allocation1 [shape = 'u32[72,128]{1,0:T(1,128)}', space=vmem, size = 0x9000, scoped, tag = 'internal scratch']
  %s0 = inlined_call_operand.vmem [shape: f32[2,16,64], index: 0, kind: input, shape index: {}]
  %s1 = inlined_call_operand.vmem [shape: f32[192,512], index: 1, kind: input, shape index: {}]
  %s2 = inlined_call_operand.vmem [shape: f32[1,512], index: 2, kind: input, shape index: {}]
  %s3 = inlined_call_operand.vmem [shape: f32[512,64], index: 3, kind: input, shape index: {}]
  %s4 = inlined_call_operand.vmem [shape: f32[4,2,16,64], index: 4, kind: output, shape index: {}]
  %s5 = sld [smem:[#allocation0]]
  $region33: #{simple_nca_forward.1} parent=0
    _
  %s7 = ssub.s32 1, %s5
  %s8 = scalar_select 0, %s7, %s5
  // Predicated region
  $region2: #{simple_nca_forward.1} parent=0 // pred_check
    _
  $region3: #{simple_nca_forward.1} parent=0 // pred_check_branch
    %10 = sbr.rel (0) target = $region5
  $region4: #{simple_nca_forward.1} parent=0 // pred_region
    _
  $region5: #{simple_nca_forward.1} parent=0 // pred_fallthru
    _
  // Predicated region
  $region6: #{simple_nca_forward.1} parent=0 // pred_check
    _
  $region7: #{simple_nca_forward.1} parent=0 // pred_check_branch
    %12 = sbr.rel (0) target = $region9
  $region8: #{simple_nca_forward.1} parent=0 // pred_region
    _
  $region9: #{simple_nca_forward.1} parent=0 // pred_fallthru
    _
  // Predicated region
  $region10: #{simple_nca_forward.1} parent=0 // pred_check
    _
  $region11: #{simple_nca_forward.1} parent=0 // pred_check_branch
    %14 = sbr.rel (0) target = $region13
  $region12: #{simple_nca_forward.1} parent=0 // pred_region
    _
  $region13: #{simple_nca_forward.1} parent=0 // pred_fallthru
    _
  // Predicated region
  $region14: #{simple_nca_forward.1} parent=0 // pred_check
    _
  $region15: #{simple_nca_forward.1} parent=0 // pred_check_branch
    %16 = sbr.rel (0) target = $region17
  $region16: #{simple_nca_forward.1} parent=0 // pred_region
    _
  $region17: #{simple_nca_forward.1} parent=0 // pred_fallthru
    _
  %v17 = vld [vmem:[%s1] sm:$0xff]
  %v18 = vld [vmem:[%s1 + $0x8] sm:$0xff]
  %v19 = vld [vmem:[%s1 + $0x10] sm:$0xff]
  %v20 = vld [vmem:[%s1 + $0x18] sm:$0xff]
  %v21 = vld [vmem:[%s1 + $0x20] sm:$0xff]
  %v22 = vld [vmem:[%s1 + $0x28] sm:$0xff]
  %v23 = vld [vmem:[%s1 + $0x30] sm:$0xff]
  %v24 = vld [vmem:[%s1 + $0x38] sm:$0xff]
  %v25 = vld [vmem:[%s1 + $0x40] sm:$0xff]
  %v26 = vld [vmem:[%s1 + $0x48] sm:$0xff]
  %v27 = vld [vmem:[%s1 + $0x50] sm:$0xff]
  %v28 = vld [vmem:[%s1 + $0x58] sm:$0xff]
  %v29 = vld [vmem:[%s1 + $0x60] sm:$0xff]
  %v30 = vld [vmem:[%s1 + $0x68] sm:$0xff]
  %v31 = vld [vmem:[%s1 + $0x70] sm:$0xff]
  %v32 = vld [vmem:[%s1 + $0x78] sm:$0xff]
  %v33 = vld [vmem:[%s1 + $0x80] sm:$0xff]
  %v34 = vld [vmem:[%s1 + $0x88] sm:$0xff]
  %v35 = vld [vmem:[%s1 + $0x90] sm:$0xff]
  %v36 = vld [vmem:[%s1 + $0x98] sm:$0xff]
  %v37 = vld [vmem:[%s1 + $0xa0] sm:$0xff]
  %v38 = vld [vmem:[%s1 + $0xa8] sm:$0xff]
  %v39 = vld [vmem:[%s1 + $0xb0] sm:$0xff]
  %v40 = vld [vmem:[%s1 + $0xb8] sm:$0xff]
  %v41 = vld [vmem:[%s1 + $0xc0] sm:$0xff]
  %v42 = vld [vmem:[%s1 + $0xc8] sm:$0xff]
  %v43 = vld [vmem:[%s1 + $0xd0] sm:$0xff]
  %v44 = vld [vmem:[%s1 + $0xd8] sm:$0xff]
  %v45 = vld [vmem:[%s1 + $0xe0] sm:$0xff]
  %v46 = vld [vmem:[%s1 + $0xe8] sm:$0xff]
  %v47 = vld [vmem:[%s1 + $0xf0] sm:$0xff]
  %v48 = vld [vmem:[%s1 + $0xf8] sm:$0xff]
  %v49 = vld [vmem:[%s1 + $0x100] sm:$0xff]
  %v50 = vld [vmem:[%s1 + $0x108] sm:$0xff]
  %v51 = vld [vmem:[%s1 + $0x110] sm:$0xff]
  %v52 = vld [vmem:[%s1 + $0x118] sm:$0xff]
  %v53 = vld [vmem:[%s1 + $0x120] sm:$0xff]
  %v54 = vld [vmem:[%s1 + $0x128] sm:$0xff]
  %v55 = vld [vmem:[%s1 + $0x130] sm:$0xff]
  %v56 = vld [vmem:[%s1 + $0x138] sm:$0xff]
  %v57 = vld [vmem:[%s1 + $0x140] sm:$0xff]
  %v58 = vld [vmem:[%s1 + $0x148] sm:$0xff]
  %v59 = vld [vmem:[%s1 + $0x150] sm:$0xff]
  %v60 = vld [vmem:[%s1 + $0x158] sm:$0xff]
  %v61 = vld [vmem:[%s1 + $0x160] sm:$0xff]
  %v62 = vld [vmem:[%s1 + $0x168] sm:$0xff]
  %v63 = vld [vmem:[%s1 + $0x170] sm:$0xff]
  %v64 = vld [vmem:[%s1 + $0x178] sm:$0xff]
  %v65 = vld [vmem:[%s1 + $0x180] sm:$0xff]
  %v66 = vld [vmem:[%s1 + $0x188] sm:$0xff]
  %v67 = vld [vmem:[%s1 + $0x190] sm:$0xff]
  %v68 = vld [vmem:[%s1 + $0x198] sm:$0xff]
  %v69 = vld [vmem:[%s1 + $0x1a0] sm:$0xff]
  %v70 = vld [vmem:[%s1 + $0x1a8] sm:$0xff]
  %v71 = vld [vmem:[%s1 + $0x1b0] sm:$0xff]
  %v72 = vld [vmem:[%s1 + $0x1b8] sm:$0xff]
  %v73 = vld [vmem:[%s1 + $0x1c0] sm:$0xff]
  %v74 = vld [vmem:[%s1 + $0x1c8] sm:$0xff]
  %v75 = vld [vmem:[%s1 + $0x1d0] sm:$0xff]
  %v76 = vld [vmem:[%s1 + $0x1d8] sm:$0xff]
  %v77 = vld [vmem:[%s1 + $0x1e0] sm:$0xff]
  %v78 = vld [vmem:[%s1 + $0x1e8] sm:$0xff]
  %v79 = vld [vmem:[%s1 + $0x1f0] sm:$0xff]
  %v80 = vld [vmem:[%s1 + $0x1f8] sm:$0xff]
  %v81 = vld [vmem:[%s1 + $0x200] sm:$0xff]
  %v82 = vld [vmem:[%s1 + $0x208] sm:$0xff]
  %v83 = vld [vmem:[%s1 + $0x210] sm:$0xff]
  %v84 = vld [vmem:[%s1 + $0x218] sm:$0xff]
  %v85 = vld [vmem:[%s1 + $0x220] sm:$0xff]
  %v86 = vld [vmem:[%s1 + $0x228] sm:$0xff]
  %v87 = vld [vmem:[%s1 + $0x230] sm:$0xff]
  %v88 = vld [vmem:[%s1 + $0x238] sm:$0xff]
  %v89 = vld [vmem:[%s1 + $0x240] sm:$0xff]
  %v90 = vld [vmem:[%s1 + $0x248] sm:$0xff]
  %v91 = vld [vmem:[%s1 + $0x250] sm:$0xff]
  %v92 = vld [vmem:[%s1 + $0x258] sm:$0xff]
  %v93 = vld [vmem:[%s1 + $0x260] sm:$0xff]
  %v94 = vld [vmem:[%s1 + $0x268] sm:$0xff]
  %v95 = vld [vmem:[%s1 + $0x270] sm:$0xff]
  %v96 = vld [vmem:[%s1 + $0x278] sm:$0xff]
  %v97 = vld [vmem:[%s1 + $0x280] sm:$0xff]
  %v98 = vld [vmem:[%s1 + $0x288] sm:$0xff]
  %v99 = vld [vmem:[%s1 + $0x290] sm:$0xff]
  %v100 = vld [vmem:[%s1 + $0x298] sm:$0xff]
  %v101 = vld [vmem:[%s1 + $0x2a0] sm:$0xff]
  %v102 = vld [vmem:[%s1 + $0x2a8] sm:$0xff]
  %v103 = vld [vmem:[%s1 + $0x2b0] sm:$0xff]
  %v104 = vld [vmem:[%s1 + $0x2b8] sm:$0xff]
  %v105 = vld [vmem:[%s1 + $0x2c0] sm:$0xff]
  %v106 = vld [vmem:[%s1 + $0x2c8] sm:$0xff]
  %v107 = vld [vmem:[%s1 + $0x2d0] sm:$0xff]
  %v108 = vld [vmem:[%s1 + $0x2d8] sm:$0xff]
  %v109 = vld [vmem:[%s1 + $0x2e0] sm:$0xff]
  %v110 = vld [vmem:[%s1 + $0x2e8] sm:$0xff]
  %v111 = vld [vmem:[%s1 + $0x2f0] sm:$0xff]
  %v112 = vld [vmem:[%s1 + $0x2f8] sm:$0xff]
  %v113 = vld [vmem:[%s2] sm:$0xf]
  %v114 = vld [vmem:[%s3] sm:$0xff]
  %v115 = vld [vmem:[%s3 + $0x8] sm:$0xff]
  %v116 = vld [vmem:[%s3 + $0x10] sm:$0xff]
  %v117 = vld [vmem:[%s3 + $0x18] sm:$0xff]
  %v118 = vld [vmem:[%s3 + $0x20] sm:$0xff]
  %v119 = vld [vmem:[%s3 + $0x28] sm:$0xff]
  %v120 = vld [vmem:[%s3 + $0x30] sm:$0xff]
  %v121 = vld [vmem:[%s3 + $0x38] sm:$0xff]
  %v122 = vld [vmem:[%s3 + $0x40] sm:$0xff]
  %v123 = vld [vmem:[%s3 + $0x48] sm:$0xff]
  %v124 = vld [vmem:[%s3 + $0x50] sm:$0xff]
  %v125 = vld [vmem:[%s3 + $0x58] sm:$0xff]
  %v126 = vld [vmem:[%s3 + $0x60] sm:$0xff]
  %v127 = vld [vmem:[%s3 + $0x68] sm:$0xff]
  %v128 = vld [vmem:[%s3 + $0x70] sm:$0xff]
  %v129 = vld [vmem:[%s3 + $0x78] sm:$0xff]
  %v130 = vld [vmem:[%s3 + $0x80] sm:$0xff]
  %v131 = vld [vmem:[%s3 + $0x88] sm:$0xff]
  %v132 = vld [vmem:[%s3 + $0x90] sm:$0xff]
  %v133 = vld [vmem:[%s3 + $0x98] sm:$0xff]
  %v134 = vld [vmem:[%s3 + $0xa0] sm:$0xff]
  %v135 = vld [vmem:[%s3 + $0xa8] sm:$0xff]
  %v136 = vld [vmem:[%s3 + $0xb0] sm:$0xff]
  %v137 = vld [vmem:[%s3 + $0xb8] sm:$0xff]
  %v138 = vld [vmem:[%s3 + $0xc0] sm:$0xff]
  %v139 = vld [vmem:[%s3 + $0xc8] sm:$0xff]
  %v140 = vld [vmem:[%s3 + $0xd0] sm:$0xff]
  %v141 = vld [vmem:[%s3 + $0xd8] sm:$0xff]
  %v142 = vld [vmem:[%s3 + $0xe0] sm:$0xff]
  %v143 = vld [vmem:[%s3 + $0xe8] sm:$0xff]
  %v144 = vld [vmem:[%s3 + $0xf0] sm:$0xff]
  %v145 = vld [vmem:[%s3 + $0xf8] sm:$0xff]
  %v146 = vld [vmem:[%s3 + $0x100] sm:$0xff]
  %v147 = vld [vmem:[%s3 + $0x108] sm:$0xff]
  %v148 = vld [vmem:[%s3 + $0x110] sm:$0xff]
  %v149 = vld [vmem:[%s3 + $0x118] sm:$0xff]
  %v150 = vld [vmem:[%s3 + $0x120] sm:$0xff]
  %v151 = vld [vmem:[%s3 + $0x128] sm:$0xff]
  %v152 = vld [vmem:[%s3 + $0x130] sm:$0xff]
  %v153 = vld [vmem:[%s3 + $0x138] sm:$0xff]
  %v154 = vld [vmem:[%s3 + $0x140] sm:$0xff]
  %v155 = vld [vmem:[%s3 + $0x148] sm:$0xff]
  %v156 = vld [vmem:[%s3 + $0x150] sm:$0xff]
  %v157 = vld [vmem:[%s3 + $0x158] sm:$0xff]
  %v158 = vld [vmem:[%s3 + $0x160] sm:$0xff]
  %v159 = vld [vmem:[%s3 + $0x168] sm:$0xff]
  %v160 = vld [vmem:[%s3 + $0x170] sm:$0xff]
  %v161 = vld [vmem:[%s3 + $0x178] sm:$0xff]
  %v162 = vld [vmem:[%s3 + $0x180] sm:$0xff]
  %v163 = vld [vmem:[%s3 + $0x188] sm:$0xff]
  %v164 = vld [vmem:[%s3 + $0x190] sm:$0xff]
  %v165 = vld [vmem:[%s3 + $0x198] sm:$0xff]
  %v166 = vld [vmem:[%s3 + $0x1a0] sm:$0xff]
  %v167 = vld [vmem:[%s3 + $0x1a8] sm:$0xff]
  %v168 = vld [vmem:[%s3 + $0x1b0] sm:$0xff]
  %v169 = vld [vmem:[%s3 + $0x1b8] sm:$0xff]
  %v170 = vld [vmem:[%s3 + $0x1c0] sm:$0xff]
  %v171 = vld [vmem:[%s3 + $0x1c8] sm:$0xff]
  %v172 = vld [vmem:[%s3 + $0x1d0] sm:$0xff]
  %v173 = vld [vmem:[%s3 + $0x1d8] sm:$0xff]
  %v174 = vld [vmem:[%s3 + $0x1e0] sm:$0xff]
  %v175 = vld [vmem:[%s3 + $0x1e8] sm:$0xff]
  %v176 = vld [vmem:[%s3 + $0x1f0] sm:$0xff]
  %v177 = vld [vmem:[%s3 + $0x1f8] sm:$0xff]
  %v178 = vlaneseq
  %v179 = vand.u32 %v178, 127
  %vm180 = vcmp.lt.s32.totalorder %v179, 0
  %v181 = vsub.s32 0, %v179
  %v182 = vsel %vm180, %v181, %v179
  %v183 = vshrl.u32 %v182, 2
  %v184 = vand.u32 %v182, 3
  %v185 = vsub.s32 0, %v184
  %v186 = vsel %vm180, %v185, %v184
  %vm187 = vcmp.ne.s32.totalorder %v186, 0
  %vm188 = vcmp.lt.s32.totalorder %v186, 0
  %vm189 = vmand %vm188, %vm187
  %v190 = vadd.s32 %v186, 4
  %v191 = vsel %vm189, %v190, %v186
  %vm192 = vcmp.eq.s32.totalorder %v191, 0
  %v193 = vld [vmem:[%s0] sm:$0xff]
  %v194 = vld [vmem:[%s0 + $0x8] sm:$0xff]
  %v195 = vld [vmem:[%s0 + $0x10] sm:$0xff]
  %v196 = vld [vmem:[%s0 + $0x18] sm:$0xff]
  %vm197 = vcmask 523264
  %198 = vst.msk [vmem:[%s4] sm:$0xff] %vm197, %v193
  %199 = vst.msk [vmem:[%s4 + $0x8] sm:$0xff] %vm197, %v194
  %200 = vst.msk [vmem:[%s4 + $0x10] sm:$0xff] %vm197, %v195
  %201 = vst.msk [vmem:[%s4 + $0x18] sm:$0xff] %vm197, %v196
  loop: start=0, step=1, limit=3
  $region18: #{simple_nca_forward.1} parent=0 // loop_pre_header
    _
  $region19: #{simple_nca_forward.1} parent=0 // loop_header
    %s203 = sphi 0, %s207
    %p204 = scmp.ge.s32.totalorder %s203, 3
    %v208 = vphi %v193, %v1176
    %v209 = vphi %v194, %v1177
    %v210 = vphi %v195, %v1178
    %v211 = vphi %v196, %v1179
  $region20: #{simple_nca_forward.1} parent=0 // loop_header_branch
    %206 = sbr.rel (%p204) target = $region24
  $region21: #{simple_nca_forward.1} parent=0 // loop_body
    %216 = vrot.lane.b32.xlu0 %v208, 124
    %v217 = vpop.permute.xlu0 %216
    %218 = vrot.lane.b32.xlu0 %v209, 124
    %v219 = vpop.permute.xlu0 %218
    %220 = vrot.lane.b32.xlu0 %v210, 124
    %v221 = vpop.permute.xlu0 %220
    %222 = vrot.lane.b32.xlu0 %v211, 124
    %v223 = vpop.permute.xlu0 %222
    %228 = vrot.lane.b32.xlu0 %v208, 60
    %v229 = vpop.permute.xlu0 %228
    %230 = vrot.lane.b32.xlu0 %v209, 60
    %v231 = vpop.permute.xlu0 %230
    %232 = vrot.lane.b32.xlu0 %v210, 60
    %v233 = vpop.permute.xlu0 %232
    %234 = vrot.lane.b32.xlu0 %v211, 60
    %v235 = vpop.permute.xlu0 %234
    %vm240 = vcmask 490496
    %v241 = vsel %vm240, %v217, %v229
    %v242 = vsel %vm240, %v219, %v231
    %v243 = vsel %vm240, %v221, %v233
    %v244 = vsel %vm240, %v223, %v235
    %245 = vrot.lane.b32.xlu0 %v208, 68
    %v246 = vpop.permute.xlu0 %245
    %247 = vrot.lane.b32.xlu0 %v209, 68
    %v248 = vpop.permute.xlu0 %247
    %249 = vrot.lane.b32.xlu0 %v210, 68
    %v250 = vpop.permute.xlu0 %249
    %251 = vrot.lane.b32.xlu0 %v211, 68
    %v252 = vpop.permute.xlu0 %251
    %257 = vrot.lane.b32.xlu0 %v208, 4
    %v258 = vpop.permute.xlu0 %257
    %259 = vrot.lane.b32.xlu0 %v209, 4
    %v260 = vpop.permute.xlu0 %259
    %261 = vrot.lane.b32.xlu0 %v210, 4
    %v262 = vpop.permute.xlu0 %261
    %263 = vrot.lane.b32.xlu0 %v211, 4
    %v264 = vpop.permute.xlu0 %263
    %vm269 = vcmask 31744
    %v270 = vsel %vm269, %v246, %v258
    %v271 = vsel %vm269, %v248, %v260
    %v272 = vsel %vm269, %v250, %v262
    %v273 = vsel %vm269, %v252, %v264
    %v274 = vmax.f32 %v208, %v241
    %v275 = vmax.f32 %v209, %v242
    %v276 = vmax.f32 %v210, %v243
    %v277 = vmax.f32 %v211, %v244
    %v278 = vmax.f32 %v274, %v270
    %v279 = vmax.f32 %v275, %v271
    %v280 = vmax.f32 %v276, %v272
    %v281 = vmax.f32 %v277, %v273
    %vm286 = vcmask 1046528
    %v287 = vrot.slane %v278, 1
    %v288 = vrot.slane %v279, 1
    %v289 = vsel %vm286, %v287, %v288
    %v290 = vrot.slane %v280, 1
    %v291 = vrot.slane %v281, 1
    %v292 = vsel %vm286, %v290, %v291
    %v299 = vsel %vm286, %v288, %v287
    %v300 = vsel %vm286, %v291, %v290
    %v301 = vmax.f32 %v278, %v289
    %v302 = vmax.f32 %v279, %v299
    %v303 = vmax.f32 %v280, %v292
    %v304 = vmax.f32 %v281, %v300
    %v305 = vrot.slane %v279, 7
    %v306 = vrot.slane %v281, 7
    %vm309 = vcmask 1040384
    %v310 = vrot.slane %v278, 7
    %v311 = vsel %vm309, %v310, %v305
    %v312 = vrot.slane %v280, 7
    %v313 = vsel %vm309, %v312, %v306
    %v318 = vsel %vm309, %v305, %v310
    %v319 = vsel %vm309, %v306, %v312
    %v320 = vmax.f32 %v301, %v318
    %v321 = vmax.f32 %v302, %v311
    %v322 = vmax.f32 %v303, %v319
    %v323 = vmax.f32 %v304, %v313
    %v324 = vsel %vm192, %v320, 0.0
    %v325 = vsel %vm192, %v321, 0.0
    %v326 = vsel %vm192, %v322, 0.0
    %v327 = vsel %vm192, %v323, 0.0
    %332 = vrot.lane.b32.xlu0 %v324, 65
    %v333 = vpop.permute.xlu0 %332
    %334 = vrot.lane.b32.xlu0 %v325, 65
    %v335 = vpop.permute.xlu0 %334
    %336 = vrot.lane.b32.xlu0 %v326, 65
    %v337 = vpop.permute.xlu0 %336
    %338 = vrot.lane.b32.xlu0 %v327, 65
    %v339 = vpop.permute.xlu0 %338
    %344 = vrot.lane.b32.xlu0 %v324, 1
    %v345 = vpop.permute.xlu0 %344
    %346 = vrot.lane.b32.xlu0 %v325, 1
    %v347 = vpop.permute.xlu0 %346
    %348 = vrot.lane.b32.xlu0 %v326, 1
    %v349 = vpop.permute.xlu0 %348
    %350 = vrot.lane.b32.xlu0 %v327, 1
    %v351 = vpop.permute.xlu0 %350
    %vm356 = vcmask 7168
    %v357 = vsel %vm356, %v333, %v345
    %v358 = vsel %vm356, %v335, %v347
    %v359 = vsel %vm356, %v337, %v349
    %v360 = vsel %vm356, %v339, %v351
    %v361 = vadd.f32 %v324, %v357
    %v362 = vadd.f32 %v325, %v358
    %v363 = vadd.f32 %v326, %v359
    %v364 = vadd.f32 %v327, %v360
    %365 = vrot.lane.b32.xlu0 %v324, 66
    %v366 = vpop.permute.xlu0 %365
    %367 = vrot.lane.b32.xlu0 %v325, 66
    %v368 = vpop.permute.xlu0 %367
    %369 = vrot.lane.b32.xlu0 %v326, 66
    %v370 = vpop.permute.xlu0 %369
    %371 = vrot.lane.b32.xlu0 %v327, 66
    %v372 = vpop.permute.xlu0 %371
    %377 = vrot.lane.b32.xlu0 %v324, 2
    %v378 = vpop.permute.xlu0 %377
    %379 = vrot.lane.b32.xlu0 %v325, 2
    %v380 = vpop.permute.xlu0 %379
    %381 = vrot.lane.b32.xlu0 %v326, 2
    %v382 = vpop.permute.xlu0 %381
    %383 = vrot.lane.b32.xlu0 %v327, 2
    %v384 = vpop.permute.xlu0 %383
    %vm389 = vcmask 15360
    %v390 = vsel %vm389, %v366, %v378
    %v391 = vsel %vm389, %v368, %v380
    %v392 = vsel %vm389, %v370, %v382
    %v393 = vsel %vm389, %v372, %v384
    %v394 = vadd.f32 %v361, %v390
    %v395 = vadd.f32 %v362, %v391
    %v396 = vadd.f32 %v363, %v392
    %v397 = vadd.f32 %v364, %v393
    %398 = vrot.lane.b32.xlu0 %v324, 67
    %v399 = vpop.permute.xlu0 %398
    %400 = vrot.lane.b32.xlu0 %v325, 67
    %v401 = vpop.permute.xlu0 %400
    %402 = vrot.lane.b32.xlu0 %v326, 67
    %v403 = vpop.permute.xlu0 %402
    %404 = vrot.lane.b32.xlu0 %v327, 67
    %v405 = vpop.permute.xlu0 %404
    %410 = vrot.lane.b32.xlu0 %v324, 3
    %v411 = vpop.permute.xlu0 %410
    %412 = vrot.lane.b32.xlu0 %v325, 3
    %v413 = vpop.permute.xlu0 %412
    %414 = vrot.lane.b32.xlu0 %v326, 3
    %v415 = vpop.permute.xlu0 %414
    %416 = vrot.lane.b32.xlu0 %v327, 3
    %v417 = vpop.permute.xlu0 %416
    %vm422 = vcmask 23552
    %v423 = vsel %vm422, %v399, %v411
    %v424 = vsel %vm422, %v401, %v413
    %v425 = vsel %vm422, %v403, %v415
    %v426 = vsel %vm422, %v405, %v417
    %v427 = vadd.f32 %v394, %v423
    %v428 = vadd.f32 %v395, %v424
    %v429 = vadd.f32 %v396, %v425
    %v430 = vadd.f32 %v397, %v426
    %vm431 = vcmp.gt.f32.partialorder %v427, 0.1
    %vm432 = vcmp.gt.f32.partialorder %v428, 0.1
    %vm433 = vcmp.gt.f32.partialorder %v429, 0.1
    %vm434 = vcmp.gt.f32.partialorder %v430, 0.1
    %v435 = vsub.f32 %v241, %v270
    %v436 = vsub.f32 %v242, %v271
    %v437 = vsub.f32 %v243, %v272
    %v438 = vsub.f32 %v244, %v273
    %v441 = vrot.slane %v436, 7
    %v442 = vrot.slane %v438, 7
    %v447 = vrot.slane %v435, 7
    %v448 = vsel %vm309, %v447, %v441
    %v449 = vrot.slane %v437, 7
    %v450 = vsel %vm309, %v449, %v442
    %v455 = vsel %vm309, %v441, %v447
    %v456 = vsel %vm309, %v442, %v449
    %v457 = vmul.f32 %v435, 2.0
    %v458 = vmul.f32 %v436, 2.0
    %v459 = vmul.f32 %v437, 2.0
    %v460 = vmul.f32 %v438, 2.0
    %v461 = vadd.f32 %v455, %v457
    %v462 = vadd.f32 %v448, %v458
    %v463 = vadd.f32 %v456, %v459
    %v464 = vadd.f32 %v450, %v460
    %v465 = vrot.slane %v435, 1
    %v466 = vrot.slane %v436, 1
    %v467 = vsel %vm286, %v465, %v466
    %v468 = vrot.slane %v437, 1
    %v469 = vrot.slane %v438, 1
    %v470 = vsel %vm286, %v468, %v469
    %v477 = vsel %vm286, %v466, %v465
    %v478 = vsel %vm286, %v469, %v468
    %v479 = vadd.f32 %v461, %v467
    %v480 = vadd.f32 %v462, %v477
    %v481 = vadd.f32 %v463, %v470
    %v482 = vadd.f32 %v464, %v478
    %v483 = vmul.f32 %v479, 0.125
    %v484 = vmul.f32 %v480, 0.125
    %v485 = vmul.f32 %v481, 0.125
    %v486 = vmul.f32 %v482, 0.125
    %v487 = vmul.f32 %v208, 2.0
    %v488 = vmul.f32 %v209, 2.0
    %v489 = vmul.f32 %v210, 2.0
    %v490 = vmul.f32 %v211, 2.0
    %v491 = vadd.f32 %v270, %v487
    %v492 = vadd.f32 %v271, %v488
    %v493 = vadd.f32 %v272, %v489
    %v494 = vadd.f32 %v273, %v490
    %v495 = vadd.f32 %v491, %v241
    %v496 = vadd.f32 %v492, %v242
    %v497 = vadd.f32 %v493, %v243
    %v498 = vadd.f32 %v494, %v244
    %v501 = vrot.slane %v496, 7
    %v502 = vrot.slane %v498, 7
    %v507 = vrot.slane %v495, 7
    %v508 = vsel %vm309, %v507, %v501
    %v509 = vrot.slane %v497, 7
    %v510 = vsel %vm309, %v509, %v502
    %v515 = vsel %vm309, %v501, %v507
    %v516 = vsel %vm309, %v502, %v509
    %v517 = vrot.slane %v495, 1
    %v518 = vrot.slane %v496, 1
    %v519 = vsel %vm286, %v517, %v518
    %v520 = vrot.slane %v497, 1
    %v521 = vrot.slane %v498, 1
    %v522 = vsel %vm286, %v520, %v521
    %v529 = vsel %vm286, %v518, %v517
    %v530 = vsel %vm286, %v521, %v520
    %v531 = vsub.f32 %v515, %v519
    %v532 = vsub.f32 %v508, %v529
    %v533 = vsub.f32 %v516, %v522
    %v534 = vsub.f32 %v510, %v530
    %v535 = vmul.f32 %v531, 0.125
    %v536 = vmul.f32 %v532, 0.125
    %v537 = vmul.f32 %v533, 0.125
    %v538 = vmul.f32 %v534, 0.125
    %543 = vrot.lane.b32.xlu0 %v483, 64
    %v544 = vpop.permute.xlu0 %543
    %545 = vrot.lane.b32.xlu0 %v484, 64
    %v546 = vpop.permute.xlu0 %545
    %547 = vrot.lane.b32.xlu0 %v485, 64
    %v548 = vpop.permute.xlu0 %547
    %549 = vrot.lane.b32.xlu0 %v486, 64
    %v550 = vpop.permute.xlu0 %549
    %v555 = vsel %vm197, %v208, %v544
    %v556 = vsel %vm197, %v209, %v546
    %v557 = vsel %vm197, %v210, %v548
    %v558 = vsel %vm197, %v211, %v550
    %v560 = vperm.slane %v113, 0
    %v561 = vperm.slane %v113, 1
    %v562 = vperm.slane %v113, 2
    %v563 = vperm.slane %v113, 3
    %v569 = vsel %vm197, %v535, 0
    %v572 = vsel %vm197, %v536, 0
    %v575 = vsel %vm197, %v537, 0
    %v578 = vsel %vm197, %v538, 0
    %580 = vmatpush.msra.mxu0 %v77
    %581 = vmatpush.msra.mxu0 %v73
    %582 = vmatpush.msra.mxu0 %v69
    %583 = vmatpush.msra.mxu0 %v65
    %584 = vmatpush.msra.mxu0 %v61
    %585 = vmatpush.msra.mxu0 %v57
    %586 = vmatpush.msra.mxu0 %v53
    %587 = vmatpush.msra.mxu0 %v49
    %588 = vmatpush.msra.mxu0 %v45
    %589 = vmatpush.msra.mxu0 %v41
    %590 = vmatpush.msra.mxu0 %v37
    %591 = vmatpush.msra.mxu0 %v33
    %592 = vmatpush.msra.mxu0 %v29
    %593 = vmatpush.msra.mxu0 %v25
    %594 = vmatpush.msra.mxu0 %v21
    %595 = vmatpush.msra.mxu0 %v17
    %596 = vmatmul.f32.gmra.mxu0 %v555
    %v597 = vpop.f32.mrf.mxu0
    %v598 = vadd.f32 %v560, %v597
    %599 = vmatmul.f32.gmra.mxu0 %v556
    %v600 = vpop.f32.mrf.mxu0
    %v601 = vadd.f32 %v560, %v600
    %602 = vmatmul.f32.gmra.mxu0 %v557
    %v603 = vpop.f32.mrf.mxu0
    %v604 = vadd.f32 %v560, %v603
    %605 = vmatmul.f32.gmra.mxu0 %v558
    %v606 = vpop.f32.mrf.mxu0
    %v607 = vadd.f32 %v560, %v606
    %608 = vdwg.mxu0
    %609 = vmatpush.msra.mxu0 0.0
    %610 = vmatpush.msra.mxu0 0.0
    %611 = vmatpush.msra.mxu0 0.0
    %612 = vmatpush.msra.mxu0 0.0
    %613 = vmatpush.msra.mxu0 0.0
    %614 = vmatpush.msra.mxu0 0.0
    %615 = vmatpush.msra.mxu0 0.0
    %616 = vmatpush.msra.mxu0 0.0
    %617 = vmatpush.msra.mxu0 %v109
    %618 = vmatpush.msra.mxu0 %v105
    %619 = vmatpush.msra.mxu0 %v101
    %620 = vmatpush.msra.mxu0 %v97
    %621 = vmatpush.msra.mxu0 %v93
    %622 = vmatpush.msra.mxu0 %v89
    %623 = vmatpush.msra.mxu0 %v85
    %624 = vmatpush.msra.mxu0 %v81
    %625 = vmatmul.f32.gmra.mxu0 %v569
    %v626 = vpop.f32.mrf.mxu0
    %v627 = vadd.f32 %v598, %v626
    %628 = vmatmul.f32.gmra.mxu0 %v572
    %v629 = vpop.f32.mrf.mxu0
    %v630 = vadd.f32 %v601, %v629
    %631 = vmatmul.f32.gmra.mxu0 %v575
    %v632 = vpop.f32.mrf.mxu0
    %v633 = vadd.f32 %v604, %v632
    %634 = vmatmul.f32.gmra.mxu0 %v578
    %v635 = vpop.f32.mrf.mxu0
    %v636 = vadd.f32 %v607, %v635
    %637 = vdwg.mxu0
    %638 = vmatpush.msra.mxu0 %v78
    %639 = vmatpush.msra.mxu0 %v74
    %640 = vmatpush.msra.mxu0 %v70
    %641 = vmatpush.msra.mxu0 %v66
    %642 = vmatpush.msra.mxu0 %v62
    %643 = vmatpush.msra.mxu0 %v58
    %644 = vmatpush.msra.mxu0 %v54
    %645 = vmatpush.msra.mxu0 %v50
    %646 = vmatpush.msra.mxu0 %v46
    %647 = vmatpush.msra.mxu0 %v42
    %648 = vmatpush.msra.mxu0 %v38
    %649 = vmatpush.msra.mxu0 %v34
    %650 = vmatpush.msra.mxu0 %v30
    %651 = vmatpush.msra.mxu0 %v26
    %652 = vmatpush.msra.mxu0 %v22
    %653 = vmatpush.msra.mxu0 %v18
    %654 = vmatmul.f32.gmra.mxu0 %v555
    %v655 = vpop.f32.mrf.mxu0
    %v656 = vadd.f32 %v561, %v655
    %657 = vmatmul.f32.gmra.mxu0 %v556
    %v658 = vpop.f32.mrf.mxu0
    %v659 = vadd.f32 %v561, %v658
    %660 = vmatmul.f32.gmra.mxu0 %v557
    %v661 = vpop.f32.mrf.mxu0
    %v662 = vadd.f32 %v561, %v661
    %663 = vmatmul.f32.gmra.mxu0 %v558
    %v664 = vpop.f32.mrf.mxu0
    %v665 = vadd.f32 %v561, %v664
    %666 = vdwg.mxu0
    %667 = vmatpush.msra.mxu0 0.0
    %668 = vmatpush.msra.mxu0 0.0
    %669 = vmatpush.msra.mxu0 0.0
    %670 = vmatpush.msra.mxu0 0.0
    %671 = vmatpush.msra.mxu0 0.0
    %672 = vmatpush.msra.mxu0 0.0
    %673 = vmatpush.msra.mxu0 0.0
    %674 = vmatpush.msra.mxu0 0.0
    %675 = vmatpush.msra.mxu0 %v110
    %676 = vmatpush.msra.mxu0 %v106
    %677 = vmatpush.msra.mxu0 %v102
    %678 = vmatpush.msra.mxu0 %v98
    %679 = vmatpush.msra.mxu0 %v94
    %680 = vmatpush.msra.mxu0 %v90
    %681 = vmatpush.msra.mxu0 %v86
    %682 = vmatpush.msra.mxu0 %v82
    %683 = vmatmul.f32.gmra.mxu0 %v569
    %v684 = vpop.f32.mrf.mxu0
    %v685 = vadd.f32 %v656, %v684
    %686 = vmatmul.f32.gmra.mxu0 %v572
    %v687 = vpop.f32.mrf.mxu0
    %v688 = vadd.f32 %v659, %v687
    %689 = vmatmul.f32.gmra.mxu0 %v575
    %v690 = vpop.f32.mrf.mxu0
    %v691 = vadd.f32 %v662, %v690
    %692 = vmatmul.f32.gmra.mxu0 %v578
    %v693 = vpop.f32.mrf.mxu0
    %v694 = vadd.f32 %v665, %v693
    %695 = vdwg.mxu0
    %696 = vmatpush.msra.mxu0 %v79
    %697 = vmatpush.msra.mxu0 %v75
    %698 = vmatpush.msra.mxu0 %v71
    %699 = vmatpush.msra.mxu0 %v67
    %700 = vmatpush.msra.mxu0 %v63
    %701 = vmatpush.msra.mxu0 %v59
    %702 = vmatpush.msra.mxu0 %v55
    %703 = vmatpush.msra.mxu0 %v51
    %704 = vmatpush.msra.mxu0 %v47
    %705 = vmatpush.msra.mxu0 %v43
    %706 = vmatpush.msra.mxu0 %v39
    %707 = vmatpush.msra.mxu0 %v35
    %708 = vmatpush.msra.mxu0 %v31
    %709 = vmatpush.msra.mxu0 %v27
    %710 = vmatpush.msra.mxu0 %v23
    %711 = vmatpush.msra.mxu0 %v19
    %712 = vmatmul.f32.gmra.mxu0 %v555
    %v713 = vpop.f32.mrf.mxu0
    %v714 = vadd.f32 %v562, %v713
    %715 = vmatmul.f32.gmra.mxu0 %v556
    %v716 = vpop.f32.mrf.mxu0
    %v717 = vadd.f32 %v562, %v716
    %718 = vmatmul.f32.gmra.mxu0 %v557
    %v719 = vpop.f32.mrf.mxu0
    %v720 = vadd.f32 %v562, %v719
    %721 = vmatmul.f32.gmra.mxu0 %v558
    %v722 = vpop.f32.mrf.mxu0
    %v723 = vadd.f32 %v562, %v722
    %724 = vdwg.mxu0
    %725 = vmatpush.msra.mxu0 0.0
    %726 = vmatpush.msra.mxu0 0.0
    %727 = vmatpush.msra.mxu0 0.0
    %728 = vmatpush.msra.mxu0 0.0
    %729 = vmatpush.msra.mxu0 0.0
    %730 = vmatpush.msra.mxu0 0.0
    %731 = vmatpush.msra.mxu0 0.0
    %732 = vmatpush.msra.mxu0 0.0
    %733 = vmatpush.msra.mxu0 %v111
    %734 = vmatpush.msra.mxu0 %v107
    %735 = vmatpush.msra.mxu0 %v103
    %736 = vmatpush.msra.mxu0 %v99
    %737 = vmatpush.msra.mxu0 %v95
    %738 = vmatpush.msra.mxu0 %v91
    %739 = vmatpush.msra.mxu0 %v87
    %740 = vmatpush.msra.mxu0 %v83
    %741 = vmatmul.f32.gmra.mxu0 %v569
    %v742 = vpop.f32.mrf.mxu0
    %v743 = vadd.f32 %v714, %v742
    %744 = vmatmul.f32.gmra.mxu0 %v572
    %v745 = vpop.f32.mrf.mxu0
    %v746 = vadd.f32 %v717, %v745
    %747 = vmatmul.f32.gmra.mxu0 %v575
    %v748 = vpop.f32.mrf.mxu0
    %v749 = vadd.f32 %v720, %v748
    %750 = vmatmul.f32.gmra.mxu0 %v578
    %v751 = vpop.f32.mrf.mxu0
    %v752 = vadd.f32 %v723, %v751
    %753 = vdwg.mxu0
    %754 = vmatpush.msra.mxu0 %v80
    %755 = vmatpush.msra.mxu0 %v76
    %756 = vmatpush.msra.mxu0 %v72
    %757 = vmatpush.msra.mxu0 %v68
    %758 = vmatpush.msra.mxu0 %v64
    %759 = vmatpush.msra.mxu0 %v60
    %760 = vmatpush.msra.mxu0 %v56
    %761 = vmatpush.msra.mxu0 %v52
    %762 = vmatpush.msra.mxu0 %v48
    %763 = vmatpush.msra.mxu0 %v44
    %764 = vmatpush.msra.mxu0 %v40
    %765 = vmatpush.msra.mxu0 %v36
    %766 = vmatpush.msra.mxu0 %v32
    %767 = vmatpush.msra.mxu0 %v28
    %768 = vmatpush.msra.mxu0 %v24
    %769 = vmatpush.msra.mxu0 %v20
    %770 = vmatmul.f32.gmra.mxu0 %v555
    %v771 = vpop.f32.mrf.mxu0
    %v772 = vadd.f32 %v563, %v771
    %773 = vmatmul.f32.gmra.mxu0 %v556
    %v774 = vpop.f32.mrf.mxu0
    %v775 = vadd.f32 %v563, %v774
    %776 = vmatmul.f32.gmra.mxu0 %v557
    %v777 = vpop.f32.mrf.mxu0
    %v778 = vadd.f32 %v563, %v777
    %779 = vmatmul.f32.gmra.mxu0 %v558
    %v780 = vpop.f32.mrf.mxu0
    %v781 = vadd.f32 %v563, %v780
    %782 = vdwg.mxu0
    %783 = vmatpush.msra.mxu0 0.0
    %784 = vmatpush.msra.mxu0 0.0
    %785 = vmatpush.msra.mxu0 0.0
    %786 = vmatpush.msra.mxu0 0.0
    %787 = vmatpush.msra.mxu0 0.0
    %788 = vmatpush.msra.mxu0 0.0
    %789 = vmatpush.msra.mxu0 0.0
    %790 = vmatpush.msra.mxu0 0.0
    %791 = vmatpush.msra.mxu0 %v112
    %792 = vmatpush.msra.mxu0 %v108
    %793 = vmatpush.msra.mxu0 %v104
    %794 = vmatpush.msra.mxu0 %v100
    %795 = vmatpush.msra.mxu0 %v96
    %796 = vmatpush.msra.mxu0 %v92
    %797 = vmatpush.msra.mxu0 %v88
    %798 = vmatpush.msra.mxu0 %v84
    %799 = vmatmul.f32.gmra.mxu0 %v569
    %v800 = vpop.f32.mrf.mxu0
    %v801 = vadd.f32 %v772, %v800
    %802 = vmatmul.f32.gmra.mxu0 %v572
    %v803 = vpop.f32.mrf.mxu0
    %v804 = vadd.f32 %v775, %v803
    %805 = vmatmul.f32.gmra.mxu0 %v575
    %v806 = vpop.f32.mrf.mxu0
    %v807 = vadd.f32 %v778, %v806
    %808 = vmatmul.f32.gmra.mxu0 %v578
    %v809 = vpop.f32.mrf.mxu0
    %v810 = vadd.f32 %v781, %v809
    %811 = vdwg.mxu0
    %v812 = vmax.f32 %v627, 0.0
    %v813 = vmax.f32 %v685, 0.0
    %v814 = vmax.f32 %v743, 0.0
    %v815 = vmax.f32 %v801, 0.0
    %v816 = vmax.f32 %v630, 0.0
    %v817 = vmax.f32 %v688, 0.0
    %v818 = vmax.f32 %v746, 0.0
    %v819 = vmax.f32 %v804, 0.0
    %v820 = vmax.f32 %v633, 0.0
    %v821 = vmax.f32 %v691, 0.0
    %v822 = vmax.f32 %v749, 0.0
    %v823 = vmax.f32 %v807, 0.0
    %v824 = vmax.f32 %v636, 0.0
    %v825 = vmax.f32 %v694, 0.0
    %v826 = vmax.f32 %v752, 0.0
    %v827 = vmax.f32 %v810, 0.0
    %828 = vmatpush.msra.mxu0 %v129
    %829 = vmatpush.msra.mxu0 %v128
    %830 = vmatpush.msra.mxu0 %v127
    %831 = vmatpush.msra.mxu0 %v126
    %832 = vmatpush.msra.mxu0 %v125
    %833 = vmatpush.msra.mxu0 %v124
    %834 = vmatpush.msra.mxu0 %v123
    %835 = vmatpush.msra.mxu0 %v122
    %836 = vmatpush.msra.mxu0 %v121
    %837 = vmatpush.msra.mxu0 %v120
    %838 = vmatpush.msra.mxu0 %v119
    %839 = vmatpush.msra.mxu0 %v118
    %840 = vmatpush.msra.mxu0 %v117
    %841 = vmatpush.msra.mxu0 %v116
    %842 = vmatpush.msra.mxu0 %v115
    %843 = vmatpush.msra.mxu0 %v114
    %844 = vmatmul.f32.gmra.mxu0 %v812
    %v845 = vpop.f32.mrf.mxu0
    %v846 = vadd.f32 0.0, %v845
    %847 = vmatmul.f32.gmra.mxu0 %v816
    %v848 = vpop.f32.mrf.mxu0
    %v849 = vadd.f32 0.0, %v848
    %850 = vmatmul.f32.gmra.mxu0 %v820
    %v851 = vpop.f32.mrf.mxu0
    %v852 = vadd.f32 0.0, %v851
    %853 = vmatmul.f32.gmra.mxu0 %v824
    %v854 = vpop.f32.mrf.mxu0
    %v855 = vadd.f32 0.0, %v854
    %856 = vdwg.mxu0
    %857 = vmatpush.msra.mxu0 %v145
    %858 = vmatpush.msra.mxu0 %v144
    %859 = vmatpush.msra.mxu0 %v143
    %860 = vmatpush.msra.mxu0 %v142
    %861 = vmatpush.msra.mxu0 %v141
    %862 = vmatpush.msra.mxu0 %v140
    %863 = vmatpush.msra.mxu0 %v139
    %864 = vmatpush.msra.mxu0 %v138
    %865 = vmatpush.msra.mxu0 %v137
    %866 = vmatpush.msra.mxu0 %v136
    %867 = vmatpush.msra.mxu0 %v135
    %868 = vmatpush.msra.mxu0 %v134
    %869 = vmatpush.msra.mxu0 %v133
    %870 = vmatpush.msra.mxu0 %v132
    %871 = vmatpush.msra.mxu0 %v131
    %872 = vmatpush.msra.mxu0 %v130
    %873 = vmatmul.f32.gmra.mxu0 %v813
    %v874 = vpop.f32.mrf.mxu0
    %v875 = vadd.f32 %v846, %v874
    %876 = vmatmul.f32.gmra.mxu0 %v817
    %v877 = vpop.f32.mrf.mxu0
    %v878 = vadd.f32 %v849, %v877
    %879 = vmatmul.f32.gmra.mxu0 %v821
    %v880 = vpop.f32.mrf.mxu0
    %v881 = vadd.f32 %v852, %v880
    %882 = vmatmul.f32.gmra.mxu0 %v825
    %v883 = vpop.f32.mrf.mxu0
    %v884 = vadd.f32 %v855, %v883
    %885 = vdwg.mxu0
    %886 = vmatpush.msra.mxu0 %v161
    %887 = vmatpush.msra.mxu0 %v160
    %888 = vmatpush.msra.mxu0 %v159
    %889 = vmatpush.msra.mxu0 %v158
    %890 = vmatpush.msra.mxu0 %v157
    %891 = vmatpush.msra.mxu0 %v156
    %892 = vmatpush.msra.mxu0 %v155
    %893 = vmatpush.msra.mxu0 %v154
    %894 = vmatpush.msra.mxu0 %v153
    %895 = vmatpush.msra.mxu0 %v152
    %896 = vmatpush.msra.mxu0 %v151
    %897 = vmatpush.msra.mxu0 %v150
    %898 = vmatpush.msra.mxu0 %v149
    %899 = vmatpush.msra.mxu0 %v148
    %900 = vmatpush.msra.mxu0 %v147
    %901 = vmatpush.msra.mxu0 %v146
    %902 = vmatmul.f32.gmra.mxu0 %v814
    %v903 = vpop.f32.mrf.mxu0
    %v904 = vadd.f32 %v875, %v903
    %905 = vmatmul.f32.gmra.mxu0 %v818
    %v906 = vpop.f32.mrf.mxu0
    %v907 = vadd.f32 %v878, %v906
    %908 = vmatmul.f32.gmra.mxu0 %v822
    %v909 = vpop.f32.mrf.mxu0
    %v910 = vadd.f32 %v881, %v909
    %911 = vmatmul.f32.gmra.mxu0 %v826
    %v912 = vpop.f32.mrf.mxu0
    %v913 = vadd.f32 %v884, %v912
    %914 = vdwg.mxu0
    %915 = vmatpush.msra.mxu0 %v177
    %916 = vmatpush.msra.mxu0 %v176
    %917 = vmatpush.msra.mxu0 %v175
    %918 = vmatpush.msra.mxu0 %v174
    %919 = vmatpush.msra.mxu0 %v173
    %920 = vmatpush.msra.mxu0 %v172
    %921 = vmatpush.msra.mxu0 %v171
    %922 = vmatpush.msra.mxu0 %v170
    %923 = vmatpush.msra.mxu0 %v169
    %924 = vmatpush.msra.mxu0 %v168
    %925 = vmatpush.msra.mxu0 %v167
    %926 = vmatpush.msra.mxu0 %v166
    %927 = vmatpush.msra.mxu0 %v165
    %928 = vmatpush.msra.mxu0 %v164
    %929 = vmatpush.msra.mxu0 %v163
    %930 = vmatpush.msra.mxu0 %v162
    %931 = vmatmul.f32.gmra.mxu0 %v815
    %v932 = vpop.f32.mrf.mxu0
    %v933 = vadd.f32 %v904, %v932
    %934 = vmatmul.f32.gmra.mxu0 %v819
    %v935 = vpop.f32.mrf.mxu0
    %v936 = vadd.f32 %v907, %v935
    %937 = vmatmul.f32.gmra.mxu0 %v823
    %v938 = vpop.f32.mrf.mxu0
    %v939 = vadd.f32 %v910, %v938
    %940 = vmatmul.f32.gmra.mxu0 %v827
    %v941 = vpop.f32.mrf.mxu0
    %v942 = vadd.f32 %v913, %v941
    %943 = vdwg.mxu0
    %v944 = vadd.f32 %v208, %v933
    %v945 = vadd.f32 %v209, %v936
    %v946 = vadd.f32 %v210, %v939
    %v947 = vadd.f32 %v211, %v942
    %952 = vrot.lane.b32.xlu0 %v944, 124
    %v953 = vpop.permute.xlu0 %952
    %954 = vrot.lane.b32.xlu0 %v945, 124
    %v955 = vpop.permute.xlu0 %954
    %956 = vrot.lane.b32.xlu0 %v946, 124
    %v957 = vpop.permute.xlu0 %956
    %958 = vrot.lane.b32.xlu0 %v947, 124
    %v959 = vpop.permute.xlu0 %958
    %964 = vrot.lane.b32.xlu0 %v944, 60
    %v965 = vpop.permute.xlu0 %964
    %966 = vrot.lane.b32.xlu0 %v945, 60
    %v967 = vpop.permute.xlu0 %966
    %968 = vrot.lane.b32.xlu0 %v946, 60
    %v969 = vpop.permute.xlu0 %968
    %970 = vrot.lane.b32.xlu0 %v947, 60
    %v971 = vpop.permute.xlu0 %970
    %v976 = vsel %vm240, %v953, %v965
    %v977 = vsel %vm240, %v955, %v967
    %v978 = vsel %vm240, %v957, %v969
    %v979 = vsel %vm240, %v959, %v971
    %980 = vrot.lane.b32.xlu0 %v944, 68
    %v981 = vpop.permute.xlu0 %980
    %982 = vrot.lane.b32.xlu0 %v945, 68
    %v983 = vpop.permute.xlu0 %982
    %984 = vrot.lane.b32.xlu0 %v946, 68
    %v985 = vpop.permute.xlu0 %984
    %986 = vrot.lane.b32.xlu0 %v947, 68
    %v987 = vpop.permute.xlu0 %986
    %992 = vrot.lane.b32.xlu0 %v944, 4
    %v993 = vpop.permute.xlu0 %992
    %994 = vrot.lane.b32.xlu0 %v945, 4
    %v995 = vpop.permute.xlu0 %994
    %996 = vrot.lane.b32.xlu0 %v946, 4
    %v997 = vpop.permute.xlu0 %996
    %998 = vrot.lane.b32.xlu0 %v947, 4
    %v999 = vpop.permute.xlu0 %998
    %v1004 = vsel %vm269, %v981, %v993
    %v1005 = vsel %vm269, %v983, %v995
    %v1006 = vsel %vm269, %v985, %v997
    %v1007 = vsel %vm269, %v987, %v999
    %v1008 = vmax.f32 %v944, %v976
    %v1009 = vmax.f32 %v945, %v977
    %v1010 = vmax.f32 %v946, %v978
    %v1011 = vmax.f32 %v947, %v979
    %v1012 = vmax.f32 %v1008, %v1004
    %v1013 = vmax.f32 %v1009, %v1005
    %v1014 = vmax.f32 %v1010, %v1006
    %v1015 = vmax.f32 %v1011, %v1007
    %v1020 = vrot.slane %v1012, 1
    %v1021 = vrot.slane %v1013, 1
    %v1022 = vsel %vm286, %v1020, %v1021
    %v1023 = vrot.slane %v1014, 1
    %v1024 = vrot.slane %v1015, 1
    %v1025 = vsel %vm286, %v1023, %v1024
    %v1032 = vsel %vm286, %v1021, %v1020
    %v1033 = vsel %vm286, %v1024, %v1023
    %v1034 = vmax.f32 %v1012, %v1022
    %v1035 = vmax.f32 %v1013, %v1032
    %v1036 = vmax.f32 %v1014, %v1025
    %v1037 = vmax.f32 %v1015, %v1033
    %v1038 = vrot.slane %v1013, 7
    %v1039 = vrot.slane %v1015, 7
    %v1042 = vrot.slane %v1012, 7
    %v1043 = vsel %vm309, %v1042, %v1038
    %v1044 = vrot.slane %v1014, 7
    %v1045 = vsel %vm309, %v1044, %v1039
    %v1050 = vsel %vm309, %v1038, %v1042
    %v1051 = vsel %vm309, %v1039, %v1044
    %v1052 = vmax.f32 %v1034, %v1050
    %v1053 = vmax.f32 %v1035, %v1043
    %v1054 = vmax.f32 %v1036, %v1051
    %v1055 = vmax.f32 %v1037, %v1045
    %v1056 = vsel %vm192, %v1052, 0.0
    %v1057 = vsel %vm192, %v1053, 0.0
    %v1058 = vsel %vm192, %v1054, 0.0
    %v1059 = vsel %vm192, %v1055, 0.0
    %1064 = vrot.lane.b32.xlu0 %v1056, 65
    %v1065 = vpop.permute.xlu0 %1064
    %1066 = vrot.lane.b32.xlu0 %v1057, 65
    %v1067 = vpop.permute.xlu0 %1066
    %1068 = vrot.lane.b32.xlu0 %v1058, 65
    %v1069 = vpop.permute.xlu0 %1068
    %1070 = vrot.lane.b32.xlu0 %v1059, 65
    %v1071 = vpop.permute.xlu0 %1070
    %1076 = vrot.lane.b32.xlu0 %v1056, 1
    %v1077 = vpop.permute.xlu0 %1076
    %1078 = vrot.lane.b32.xlu0 %v1057, 1
    %v1079 = vpop.permute.xlu0 %1078
    %1080 = vrot.lane.b32.xlu0 %v1058, 1
    %v1081 = vpop.permute.xlu0 %1080
    %1082 = vrot.lane.b32.xlu0 %v1059, 1
    %v1083 = vpop.permute.xlu0 %1082
    %v1088 = vsel %vm356, %v1065, %v1077
    %v1089 = vsel %vm356, %v1067, %v1079
    %v1090 = vsel %vm356, %v1069, %v1081
    %v1091 = vsel %vm356, %v1071, %v1083
    %v1092 = vadd.f32 %v1056, %v1088
    %v1093 = vadd.f32 %v1057, %v1089
    %v1094 = vadd.f32 %v1058, %v1090
    %v1095 = vadd.f32 %v1059, %v1091
    %1096 = vrot.lane.b32.xlu0 %v1056, 66
    %v1097 = vpop.permute.xlu0 %1096
    %1098 = vrot.lane.b32.xlu0 %v1057, 66
    %v1099 = vpop.permute.xlu0 %1098
    %1100 = vrot.lane.b32.xlu0 %v1058, 66
    %v1101 = vpop.permute.xlu0 %1100
    %1102 = vrot.lane.b32.xlu0 %v1059, 66
    %v1103 = vpop.permute.xlu0 %1102
    %1108 = vrot.lane.b32.xlu0 %v1056, 2
    %v1109 = vpop.permute.xlu0 %1108
    %1110 = vrot.lane.b32.xlu0 %v1057, 2
    %v1111 = vpop.permute.xlu0 %1110
    %1112 = vrot.lane.b32.xlu0 %v1058, 2
    %v1113 = vpop.permute.xlu0 %1112
    %1114 = vrot.lane.b32.xlu0 %v1059, 2
    %v1115 = vpop.permute.xlu0 %1114
    %v1120 = vsel %vm389, %v1097, %v1109
    %v1121 = vsel %vm389, %v1099, %v1111
    %v1122 = vsel %vm389, %v1101, %v1113
    %v1123 = vsel %vm389, %v1103, %v1115
    %v1124 = vadd.f32 %v1092, %v1120
    %v1125 = vadd.f32 %v1093, %v1121
    %v1126 = vadd.f32 %v1094, %v1122
    %v1127 = vadd.f32 %v1095, %v1123
    %1128 = vrot.lane.b32.xlu0 %v1056, 67
    %v1129 = vpop.permute.xlu0 %1128
    %1130 = vrot.lane.b32.xlu0 %v1057, 67
    %v1131 = vpop.permute.xlu0 %1130
    %1132 = vrot.lane.b32.xlu0 %v1058, 67
    %v1133 = vpop.permute.xlu0 %1132
    %1134 = vrot.lane.b32.xlu0 %v1059, 67
    %v1135 = vpop.permute.xlu0 %1134
    %1140 = vrot.lane.b32.xlu0 %v1056, 3
    %v1141 = vpop.permute.xlu0 %1140
    %1142 = vrot.lane.b32.xlu0 %v1057, 3
    %v1143 = vpop.permute.xlu0 %1142
    %1144 = vrot.lane.b32.xlu0 %v1058, 3
    %v1145 = vpop.permute.xlu0 %1144
    %1146 = vrot.lane.b32.xlu0 %v1059, 3
    %v1147 = vpop.permute.xlu0 %1146
    %v1152 = vsel %vm422, %v1129, %v1141
    %v1153 = vsel %vm422, %v1131, %v1143
    %v1154 = vsel %vm422, %v1133, %v1145
    %v1155 = vsel %vm422, %v1135, %v1147
    %v1156 = vadd.f32 %v1124, %v1152
    %v1157 = vadd.f32 %v1125, %v1153
    %v1158 = vadd.f32 %v1126, %v1154
    %v1159 = vadd.f32 %v1127, %v1155
    %vm1160 = vcmp.gt.f32.partialorder %v1156, 0.1
    %vm1161 = vcmp.gt.f32.partialorder %v1157, 0.1
    %vm1162 = vcmp.gt.f32.partialorder %v1158, 0.1
    %vm1163 = vcmp.gt.f32.partialorder %v1159, 0.1
    %vm1164 = vmand %vm431, %vm1160
    %vm1165 = vmand %vm432, %vm1161
    %vm1166 = vmand %vm433, %vm1162
    %vm1167 = vmand %vm434, %vm1163
    %v1168 = vsel %vm1164, 1, 0
    %v1169 = vsel %vm1165, 1, 0
    %v1170 = vsel %vm1166, 1, 0
    %v1171 = vsel %vm1167, 1, 0
    %v1172 = vcvt.s32.f32 %v1168
    %v1173 = vcvt.s32.f32 %v1169
    %v1174 = vcvt.s32.f32 %v1170
    %v1175 = vcvt.s32.f32 %v1171
    %v1176 = vmul.f32 %v944, %v1172
    %v1177 = vmul.f32 %v945, %v1173
    %v1178 = vmul.f32 %v946, %v1174
    %v1179 = vmul.f32 %v947, %v1175
    %s1180 = sadd.s32 %s203, 1
    %s1181 = smul.u32 %s1180, 32
    %s1182 = scalar_lea.vmem %s4, %s1181
    %1183 = vst.msk [vmem:[%s1182] sm:$0xff] %vm197, %v1176
    %1184 = vst.msk [vmem:[%s1182 + $0x8] sm:$0xff] %vm197, %v1177
    %1185 = vst.msk [vmem:[%s1182 + $0x10] sm:$0xff] %vm197, %v1178
    %1186 = vst.msk [vmem:[%s1182 + $0x18] sm:$0xff] %vm197, %v1179
  $region22: #{simple_nca_forward.1} parent=0 // loop_footer
    %s207 = sadd.s32 1, %s203
  $region23: #{simple_nca_forward.1} parent=0 // loop_footer_branch
    %202 = sbr.rel target = $region19
  $region24: #{simple_nca_forward.1} parent=0 // loop_exit
    _
  // Predicated region
  $region25: #{simple_nca_forward.1} parent=0 // pred_check
    _
  $region26: #{simple_nca_forward.1} parent=0 // pred_check_branch
    %1188 = sbr.rel (0) target = $region28
  $region27: #{simple_nca_forward.1} parent=0 // pred_region
    _
  $region28: #{simple_nca_forward.1} parent=0 // pred_fallthru
    _
  // Predicated region
  $region29: #{simple_nca_forward.1} parent=0 // pred_check
    _
  $region30: #{simple_nca_forward.1} parent=0 // pred_check_branch
    %1190 = sbr.rel (0) target = $region32
  $region31: #{simple_nca_forward.1} parent=0 // pred_region
    _
  $region32: #{simple_nca_forward.1} parent=0 // pred_fallthru
    _

</llo_original>
